<compile_context>
chip_gen: v7x
topology: tpu7x:2x2x1
jax: 0.10.0
libtpu: 0.0.40
codegen_flags: <defaults>
</compile_context>

<pallas_src>
import functools

import jax
import jax.numpy as jnp
from jax.experimental import pallas as pl
from jax.experimental.pallas import tpu as pltpu

LANE = 128


def _round_up(x: int, m: int) -> int:
    return (x + m - 1) // m * m


def _vmem_limit_bytes() -> int:
    """~75% of physical per-core VMEM (v7x: 48 MiB, v5e/v6e: 96 MiB)."""
    phys = 64 * 1024 * 1024  # conservative fallback = v7x per-TC VMEM
    try:
        info = pltpu.get_tpu_info()
        phys = int(getattr(info, "vmem_capacity_bytes", phys)) or phys
    except Exception:
        pass
    return int(phys * 3 // 4)


def _pick_tile(np_dim: int, cap: int) -> int:
    """Largest multiple of 128 that divides np_dim and is <= cap."""
    cap = max(LANE, min(cap, np_dim))
    best = LANE
    for cand in range(LANE, cap + 1, LANE):
        if np_dim % cand == 0:
            best = cand
    return best


# ----------------------------------------------------------------------------
# FUSED path: adj resident across all layers, weights streamed per layer.
# ----------------------------------------------------------------------------
def _fused_gcn_kernel(adj_ref, x_ref, w_ref, b_ref, o_ref, h_scr, *,
                      num_layers: int, activation):
    """One grid step == one layer.

    adj_ref: (Np, Np)      bf16  (constant block index -> resident)
    x_ref:   (Np, Fp)      bf16  (resident)
    w_ref:   (1, Fp, Fp)   bf16  (streamed per layer)
    b_ref:   (1, 1, Fp)    f32   (streamed per layer)
    o_ref:   (Np, Fp)      f32
    h_scr:   (Np, Fp)      bf16  VMEM scratch: running hidden state
    """
    l = pl.program_id(0)

    @pl.when(l == 0)
    def _():
        h_scr[...] = x_ref[...]

    # X @ W on the MXU, f32 accumulate.
    xw = jnp.dot(h_scr[...], w_ref[0], preferred_element_type=jnp.float32)
    # A @ (X W) on the MXU; feed the dot straight from the input buffer.
    hf = jnp.dot(adj_ref[...], xw.astype(jnp.bfloat16),
                 preferred_element_type=jnp.float32)
    hf = hf + b_ref[0]

    @pl.when(l < num_layers - 1)
    def _():
        h_scr[...] = activation(hf).astype(jnp.bfloat16)

    @pl.when(l == num_layers - 1)
    def _():
        o_ref[...] = hf


def _fused_forward(adj_p, x_p, w_stack, b_stack, *, num_layers, activation,
                   vmem_limit):
    n_pad = adj_p.shape[0]
    f_pad = w_stack.shape[-1]

    flops = num_layers * (2 * n_pad * f_pad * f_pad + 2 * n_pad * n_pad * f_pad)
    bytes_accessed = (
        adj_p.size * adj_p.dtype.itemsize
        + x_p.size * x_p.dtype.itemsize
        + w_stack.size * w_stack.dtype.itemsize
        + b_stack.size * b_stack.dtype.itemsize
        + n_pad * f_pad * 4)

    kernel = functools.partial(_fused_gcn_kernel, num_layers=num_layers,
                               activation=activation)
    return pl.pallas_call(
        kernel,
        out_shape=jax.ShapeDtypeStruct((n_pad, f_pad), jnp.float32),
        grid=(num_layers,),
        in_specs=[
            pl.BlockSpec((n_pad, n_pad), lambda l: (0, 0)),
            pl.BlockSpec((n_pad, f_pad), lambda l: (0, 0)),
            pl.BlockSpec((1, f_pad, f_pad), lambda l: (l, 0, 0)),
            pl.BlockSpec((1, 1, f_pad), lambda l: (l, 0, 0)),
        ],
        out_specs=pl.BlockSpec((n_pad, f_pad), lambda l: (0, 0)),
        scratch_shapes=[pltpu.VMEM((n_pad, f_pad), jnp.bfloat16)],
        cost_estimate=pl.CostEstimate(
            flops=flops, transcendentals=0, bytes_accessed=bytes_accessed),
        compiler_params=pltpu.CompilerParams(
            dimension_semantics=("arbitrary",),
            vmem_limit_bytes=vmem_limit),
    )(adj_p, x_p, w_stack, b_stack)


# ----------------------------------------------------------------------------
# TILED path: per layer, XW once, then (row-tile, K-tile) aggregation.
# ----------------------------------------------------------------------------
def _xw_kernel(h_ref, w_ref, o_ref):
    o_ref[...] = jnp.dot(h_ref[...], w_ref[...],
                         preferred_element_type=jnp.float32).astype(o_ref.dtype)


def _aggregate_kernel(adj_ref, xw_ref, b_ref, o_ref, acc_ref, *,
                      apply_act: bool, activation):
    """out[i] = act( sum_k adj[i, k] @ xw[k] + b )."""
    k = pl.program_id(1)

    @pl.when(k == 0)
    def _():
        acc_ref[...] = jnp.zeros_like(acc_ref)

    acc_ref[...] += jnp.dot(adj_ref[...], xw_ref[...],
                            preferred_element_type=jnp.float32)

    @pl.when(k == pl.num_programs(1) - 1)
    def _():
        out = acc_ref[...] + b_ref[...]
        if apply_act:
            out = activation(out)
        o_ref[...] = out.astype(o_ref.dtype)


def _tiled_layer(adj_p, h_p, w, b, *, apply_act, activation, tile_m, tile_k,
                 vmem_limit, out_dtype):
    n_pad = adj_p.shape[0]
    f_in = h_p.shape[1]
    f_out = w.shape[-1]

    # 1) XW = H @ W, computed once per layer (row-tiled over H), stored bf16.
    xw = pl.pallas_call(
        _xw_kernel,
        out_shape=jax.ShapeDtypeStruct((n_pad, f_out), jnp.bfloat16),
        grid=(n_pad // tile_m,),
        in_specs=[
            pl.BlockSpec((tile_m, f_in), lambda i: (i, 0)),
            pl.BlockSpec((f_in, f_out), lambda i: (0, 0)),
        ],
        out_specs=pl.BlockSpec((tile_m, f_out), lambda i: (i, 0)),
        compiler_params=pltpu.CompilerParams(
            dimension_semantics=("parallel",),
            vmem_limit_bytes=vmem_limit),
    )(h_p, w)

    # 2) out = act(adj @ XW + b): row tiles parallel, K (adj-column) tiles
    #    accumulated in a resident f32 VMEM scratch.
    gm, gk = n_pad // tile_m, n_pad // tile_k
    flops = 2 * n_pad * n_pad * f_out
    bytes_accessed = (adj_p.size * adj_p.dtype.itemsize
                      + xw.size * 2 + b.size * 4
                      + n_pad * f_out * jnp.dtype(out_dtype).itemsize)
    kernel = functools.partial(_aggregate_kernel, apply_act=apply_act,
                               activation=activation)
    return pl.pallas_call(
        kernel,
        out_shape=jax.ShapeDtypeStruct((n_pad, f_out), out_dtype),
        grid=(gm, gk),
        in_specs=[
            pl.BlockSpec((tile_m, tile_k), lambda i, k: (i, k)),
            pl.BlockSpec((tile_k, f_out), lambda i, k: (k, 0)),
            pl.BlockSpec((1, f_out), lambda i, k: (0, 0)),
        ],
        out_specs=pl.BlockSpec((tile_m, f_out), lambda i, k: (i, 0)),
        scratch_shapes=[pltpu.VMEM((tile_m, f_out), jnp.float32)],
        cost_estimate=pl.CostEstimate(
            flops=flops, transcendentals=0, bytes_accessed=bytes_accessed),
        compiler_params=pltpu.CompilerParams(
            dimension_semantics=("parallel", "arbitrary"),
            vmem_limit_bytes=vmem_limit),
    )(adj_p, xw, b)


# ----------------------------------------------------------------------------
# Module wrapper.
# ----------------------------------------------------------------------------
class DistGCNPallas:
    """JAX/Pallas re-implementation of DistGCN's forward pass.

    Each DistGConv layer is the standard GCN propagation
    h' = adj @ (h @ W) + b (single-rank case of the distributed layer);
    `activation` is applied between layers, none after the last layer.
    """

    def __init__(self, input_size, hidden_size, output_size, num_layers, key,
                 activation=jax.nn.relu, mode="auto", max_tile=512):
        assert mode in ("auto", "fused", "tiled")
        self.num_layers = num_layers
        self.output_size = output_size
        self.activation = activation
        self.mode = mode
        self.max_tile = max_tile
        self.vmem_limit = _vmem_limit_bytes()

        dims = [input_size] + [hidden_size] * (num_layers - 1) + [output_size]

        # Reference (unpadded, f32) parameters.
        self.params = []
        for i in range(num_layers):
            key, kw = jax.random.split(key)
            fin, fout = dims[i], dims[i + 1]
            scale = 1.0 / jnp.sqrt(jnp.float32(fin))
            w = jax.random.normal(kw, (fin, fout), jnp.float32) * scale
            b = jnp.zeros((1, fout), jnp.float32)
            self.params.append((w, b))

        # Pre-pack once: lane-dense (every feature dim padded to a multiple of
        # 128), stacked per layer, bf16 weights + f32 biases.
        self.f_pad = _round_up(max(dims), LANE)
        w_stack = jnp.zeros((num_layers, self.f_pad, self.f_pad), jnp.float32)
        b_stack = jnp.zeros((num_layers, 1, self.f_pad), jnp.float32)
        for i, (w, b) in enumerate(self.params):
            w_stack = w_stack.at[i, : w.shape[0], : w.shape[1]].set(w)
            b_stack = b_stack.at[i, :, : b.shape[1]].set(b)
        self.w_stack = w_stack.astype(jnp.bfloat16)
        self.b_stack = b_stack

    def _use_fused(self, n_pad: int) -> bool:
        if self.mode == "fused":
            return True
        if self.mode == "tiled":
            return False
        # Conservative footprint estimate for the fused kernel (count adj
        # twice for buffering slack, plus x, out, H scratch, streamed W/b).
        fused_bytes = (2 * n_pad * n_pad * 2
                       + n_pad * self.f_pad * (2 + 4 + 2)
                       + 2 * self.f_pad * self.f_pad * 2
                       + 2 * self.f_pad * 4)
        return fused_bytes <= self.vmem_limit

    def __call__(self, x, adj):
        n, f_in = x.shape
        n_pad = _round_up(n, LANE)  # adj last dim is a lane dim -> 128-dense
        adj_p = jnp.pad(adj, ((0, n_pad - n), (0, n_pad - n))).astype(jnp.bfloat16)
        x_p = jnp.pad(x, ((0, n_pad - n), (0, self.f_pad - f_in))).astype(jnp.bfloat16)

        if self._use_fused(n_pad):
            out_p = _fused_forward(
                adj_p, x_p, self.w_stack, self.b_stack,
                num_layers=self.num_layers, activation=self.activation,
                vmem_limit=self.vmem_limit)
        else:
            tile = _pick_tile(n_pad, self.max_tile)
            h = x_p
            out_p = None
            for l in range(self.num_layers):
                apply_act = l < self.num_layers - 1
                out_dtype = jnp.bfloat16 if apply_act else jnp.float32
                out_p = _tiled_layer(
                    adj_p, h, self.w_stack[l], self.b_stack[l],
                    apply_act=apply_act, activation=self.activation,
                    tile_m=tile, tile_k=tile,
                    vmem_limit=self.vmem_limit, out_dtype=out_dtype)
                h = out_p
        return out_p[:n, : self.output_size]


# ----------------------------------------------------------------------------
# References.
# ----------------------------------------------------------------------------
def reference_forward_f32(x, adj, params, num_layers):
    """Pure-f32 reference of the module semantics."""
    h = x
    out = None
    for i, (w, b) in enumerate(params):
        out = adj @ (h @ w) + b
        h = jnp.maximum(out, 0.0) if i < num_layers - 1 else out
    return out


def reference_forward_bf16(x, adj, params, num_layers):
    """Reference mirroring the kernels' bf16-input / f32-accumulate scheme."""
    adj_bf = adj.astype(jnp.bfloat16)
    h = x.astype(jnp.bfloat16)
    out = None
    for i, (w, b) in enumerate(params):
        xw = jnp.dot(h, w.astype(jnp.bfloat16), preferred_element_type=jnp.float32)
        out = jnp.dot(adj_bf, xw.astype(jnp.bfloat16),
                      preferred_element_type=jnp.float32) + b
        if i < num_layers - 1:
            out = jnp.maximum(out, 0.0)
        h = out.astype(jnp.bfloat16)
    return out


if __name__ == "__main__":
    key = jax.random.PRNGKey(0)
    k_x, k_adj, k_model, k_x2, k_adj2 = jax.random.split(key, 5)

    N = 16            # number of graph nodes
    input_size = 8
    hidden_size = 32
    output_size = 8
    num_layers = 3

    x = jax.random.normal(k_x, (N, input_size), jnp.float32)
    # symmetric, row-normalized dense adjacency
    a = jax.random.uniform(k_adj, (N, N), jnp.float32)
    adj = (a + a.T) * 0.5
    adj = adj / jnp.sum(adj, axis=-1, keepdims=True)

    # --- small graph: auto dispatch -> fused (adj resident across layers) ---
    model = DistGCNPallas(input_size, hidden_size, output_size, num_layers,
                          k_model, activation=jax.nn.relu, mode="auto")
    out = jax.block_until_ready(model(x, adj))
    assert out.shape == (N, output_size)

    ref_bf16 = reference_forward_bf16(x, adj, model.params, num_layers)
    assert jnp.allclose(out, ref_bf16, atol=2e-3, rtol=2e-3)
    ref_f32 = reference_forward_f32(x, adj, model.params, num_layers)
    assert jnp.allclose(out, ref_f32, atol=5e-2, rtol=5e-2)

    # --- force the row/K-tiled streaming path (128-wide tiles so the (row, K)
    #     grid actually iterates and exercises init/finalize + accumulator) ---
    model_tiled = DistGCNPallas(input_size, hidden_size, output_size,
                                num_layers, k_model, activation=jax.nn.relu,
                                mode="tiled", max_tile=128)
    N2 = 384  # pads to 3 row tiles x 3 K tiles of 128
    x2 = jax.random.normal(k_x2, (N2, input_size), jnp.float32)
    a2 = jax.random.uniform(k_adj2, (N2, N2), jnp.float32)
    adj2 = (a2 + a2.T) * 0.5
    adj2 = adj2 / jnp.sum(adj2, axis=-1, keepdims=True)

    out2 = jax.block_until_ready(model_tiled(x2, adj2))
    assert out2.shape == (N2, output_size)
    ref2_bf16 = reference_forward_bf16(x2, adj2, model_tiled.params, num_layers)
    assert jnp.allclose(out2, ref2_bf16, atol=2e-3, rtol=2e-3)

    print("KERNEL_OK")
</pallas_src>

<mosaic_0001>
module attributes {stable_mosaic.version = 11 : i64} {
  func.func @_fused_gcn_kernel(%arg0: i32, %arg1: memref<128x128xbf16, #tpu.memory_space<vmem>>, %arg2: memref<128x128xbf16, #tpu.memory_space<vmem>>, %arg3: memref<1x128x128xbf16, #tpu.memory_space<vmem>>, %arg4: memref<1x1x128xf32, #tpu.memory_space<vmem>>, %arg5: memref<128x128xf32, #tpu.memory_space<vmem>>, %arg6: memref<128x128xbf16, #tpu.memory_space<vmem>>) attributes {dimension_semantics = [#tpu.dimension_semantics<arbitrary>], iteration_bounds = array<i64: 3>, scalar_prefetch = 0 : i64, scratch_operands = 1 : i64, tpu.core_type = #tpu.core_type<tc>, window_params = [{pipeline_mode = #tpu.pipeline_mode<synchronous>, transform_indices = @transform_0, window_bounds = array<i64: 128, 128>}, {pipeline_mode = #tpu.pipeline_mode<synchronous>, transform_indices = @transform_1, window_bounds = array<i64: 128, 128>}, {transform_indices = @transform_2, window_bounds = array<i64: 1, 128, 128>}, {transform_indices = @transform_3, window_bounds = array<i64: 1, 1, 128>}, {pipeline_mode = #tpu.pipeline_mode<synchronous>, transform_indices = @transform_4, window_bounds = array<i64: 128, 128>}]} {
    %c0_i32 = arith.constant 0 : i32
    %0 = arith.cmpi eq, %arg0, %c0_i32 : i32
    %1 = arith.extui %0 : i1 to i32
    %c0_i32_0 = arith.constant 0 : i32
    %2 = arith.cmpi ne, %1, %c0_i32_0 : i32
    scf.if %2 {
      %c0_14 = arith.constant 0 : index
      %c0_15 = arith.constant 0 : index
      %20 = vector.load %arg2[%c0_14, %c0_15] : memref<128x128xbf16, #tpu.memory_space<vmem>>, vector<128x128xbf16>
      %c0_16 = arith.constant 0 : index
      %c0_17 = arith.constant 0 : index
      %21 = vector.load %arg6[%c0_16, %c0_17] : memref<128x128xbf16, #tpu.memory_space<vmem>>, vector<128x128xbf16>
      tpu.vector_store %arg6[%c0_16, %c0_17], %20 {strides = array<i32>} : memref<128x128xbf16, #tpu.memory_space<vmem>>, vector<128x128xbf16>,
    } else {
    }
    %c0 = arith.constant 0 : index
    %c0_1 = arith.constant 0 : index
    %3 = vector.load %arg6[%c0, %c0_1] : memref<128x128xbf16, #tpu.memory_space<vmem>>, vector<128x128xbf16>
    %c0_2 = arith.constant 0 : index
    %c0_3 = arith.constant 0 : index
    %c0_4 = arith.constant 0 : index
    %4 = vector.load %arg3[%c0_2, %c0_3, %c0_4] : memref<1x128x128xbf16, #tpu.memory_space<vmem>>, vector<1x128x128xbf16>
    %5 = vector.shape_cast %4 : vector<1x128x128xbf16> to vector<128x128xbf16>
    %cst = arith.constant dense<0.000000e+00> : vector<128x128xf32>
    %6 = tpu.matmul %3, %5, %cst {dimension_numbers = #tpu.dot_dimension_numbers<[1], [0], [0], [1], [0, 0, 1, 1], [], []>} : vector<128x128xbf16>, vector<128x128xbf16>, vector<128x128xf32> -> vector<128x128xf32>
    %c0_5 = arith.constant 0 : index
    %c0_6 = arith.constant 0 : index
    %7 = vector.load %arg1[%c0_5, %c0_6] : memref<128x128xbf16, #tpu.memory_space<vmem>>, vector<128x128xbf16>
    %8 = arith.truncf %6 : vector<128x128xf32> to vector<128x128xbf16>
    %cst_7 = arith.constant dense<0.000000e+00> : vector<128x128xf32>
    %9 = tpu.matmul %7, %8, %cst_7 {dimension_numbers = #tpu.dot_dimension_numbers<[1], [0], [0], [1], [0, 0, 1, 1], [], []>} : vector<128x128xbf16>, vector<128x128xbf16>, vector<128x128xf32> -> vector<128x128xf32>
    %c0_8 = arith.constant 0 : index
    %c0_9 = arith.constant 0 : index
    %c0_10 = arith.constant 0 : index
    %10 = vector.load %arg4[%c0_8, %c0_9, %c0_10] : memref<1x1x128xf32, #tpu.memory_space<vmem>>, vector<1x1x128xf32>
    %11 = vector.shape_cast %10 : vector<1x1x128xf32> to vector<1x128xf32>
    %12 = vector.broadcast %11 : vector<1x128xf32> to vector<128x128xf32>
    %13 = arith.addf %9, %12 : vector<128x128xf32>
    %c2_i32 = arith.constant 2 : i32
    %14 = arith.cmpi slt, %arg0, %c2_i32 : i32
    %15 = arith.extui %14 : i1 to i32
    %c0_i32_11 = arith.constant 0 : i32
    %16 = arith.cmpi ne, %15, %c0_i32_11 : i32
    scf.if %16 {
      %cst_14 = arith.constant 0.000000e+00 : f32
      %20 = vector.broadcast %cst_14 : f32 to vector<128x128xf32>
      %21 = arith.maximumf %13, %20 : vector<128x128xf32>
      %22 = arith.truncf %21 : vector<128x128xf32> to vector<128x128xbf16>
      %c0_15 = arith.constant 0 : index
      %c0_16 = arith.constant 0 : index
      %23 = vector.load %arg6[%c0_15, %c0_16] : memref<128x128xbf16, #tpu.memory_space<vmem>>, vector<128x128xbf16>
      tpu.vector_store %arg6[%c0_15, %c0_16], %22 {strides = array<i32>} : memref<128x128xbf16, #tpu.memory_space<vmem>>, vector<128x128xbf16>,
    } else {
    }
    %c2_i32_12 = arith.constant 2 : i32
    %17 = arith.cmpi eq, %arg0, %c2_i32_12 : i32
    %18 = arith.extui %17 : i1 to i32
    %c0_i32_13 = arith.constant 0 : i32
    %19 = arith.cmpi ne, %18, %c0_i32_13 : i32
    scf.if %19 {
      %c0_14 = arith.constant 0 : index
      %c0_15 = arith.constant 0 : index
      %20 = vector.load %arg5[%c0_14, %c0_15] : memref<128x128xf32, #tpu.memory_space<vmem>>, vector<128x128xf32>
      tpu.vector_store %arg5[%c0_14, %c0_15], %13 {strides = array<i32>} : memref<128x128xf32, #tpu.memory_space<vmem>>, vector<128x128xf32>,
    } else {
    }
    return
  }
  func.func @transform_0(%arg0: i32) -> (i32, i32) {
    %c0_i32 = arith.constant 0 : i32
    %c0_i32_0 = arith.constant 0 : i32
    %c0_i32_1 = arith.constant 0 : i32
    return %c0_i32, %c0_i32_0 : i32, i32
  }
  func.func @transform_1(%arg0: i32) -> (i32, i32) {
    %c0_i32 = arith.constant 0 : i32
    %c0_i32_0 = arith.constant 0 : i32
    %c0_i32_1 = arith.constant 0 : i32
    return %c0_i32, %c0_i32_0 : i32, i32
  }
  func.func @transform_2(%arg0: i32) -> (i32, i32, i32) {
    %c0_i32 = arith.constant 0 : i32
    %c0_i32_0 = arith.constant 0 : i32
    %c0_i32_1 = arith.constant 0 : i32
    return %arg0, %c0_i32, %c0_i32_0 : i32, i32, i32
  }
  func.func @transform_3(%arg0: i32) -> (i32, i32, i32) {
    %c0_i32 = arith.constant 0 : i32
    %c0_i32_0 = arith.constant 0 : i32
    %c0_i32_1 = arith.constant 0 : i32
    return %arg0, %c0_i32, %c0_i32_0 : i32, i32, i32
  }
  func.func @transform_4(%arg0: i32) -> (i32, i32) {
    %c0_i32 = arith.constant 0 : i32
    %c0_i32_0 = arith.constant 0 : i32
    %c0_i32_1 = arith.constant 0 : i32
    return %c0_i32, %c0_i32_0 : i32, i32
  }
}

</mosaic_0001>

<llo_original>
// kernel: tpu_custom_call.1
$region0: #{tpu_custom_call.1}
  #allocation0 [shape = 'u32[]', space=smem, size = 0x4, offset = 0x4, fixed_abs, tag = 'smem constant byte address 0x4 - core index']
  #allocation1 [shape = 'u32[144,128]{1,0:T(1,128)}', space=vmem, size = 0x12000, scoped, tag = 'internal scratch']
  #allocation2 [shape = 'bf16[128,128]{1,0:T(16,128)(2,1)}', space=vmem, size = 0x8000, scoped, tag = 'scratch operand']
  %s0 = inlined_call_operand.hbm [shape: bf16[128,128], index: 0, kind: input, shape index: {}]
  %s1 = inlined_call_operand.hbm [shape: bf16[128,128], index: 1, kind: input, shape index: {}]
  %s2 = inlined_call_operand.hbm [shape: bf16[3,128,128], index: 2, kind: input, shape index: {}]
  %s3 = inlined_call_operand.vmem [shape: f32[3,1,128], index: 3, kind: input, shape index: {}]
  %s4 = inlined_call_operand.hbm [shape: f32[128,128], index: 4, kind: output, shape index: {}]
  %s5 = sld [smem:[#allocation0]]
  $region73: #{tpu_custom_call.1} parent=0
    _
  %s7 = ssub.s32 1, %s5
  %s8 = scalar_select 0, %s7, %s5
  $region1: #{tpu_custom_call.1} parent=0
    #allocation3 [shape = 'u8[32768]{0}', space=vmem, size = 0x8000, scoped, tag = 'input window, operand 0, single buffered']
    #allocation4 [shape = 's32[2]{0}', space=sflag, size = 0x8, scoped, tag = 'scoped memory for tpu_custom_call.1']
    #allocation5 [shape = 's32[2]{0}', space=sflag, size = 0x8, scoped, tag = 'scoped memory for tpu_custom_call.1']
    #allocation6 [shape = 'u8[32768]{0}', space=vmem, size = 0x8000, scoped, tag = 'input window, operand 1, single buffered']
    #allocation7 [shape = 's32[1]{0}', space=sflag, size = 0x4, scoped, tag = 'scoped memory for tpu_custom_call.1']
    #allocation8 [shape = 'u8[65536]{0}', space=vmem, size = 0x10000, scoped, tag = 'input window, operand 2']
    #allocation9 [shape = 'u8[65536]{0}', space=vmem, size = 0x10000, scoped, tag = 'output window, operand 0, single buffered']
    %9 = vsyncpa [#allocation4], 0
    %10 = vsyncpa [#allocation7], 0
    %11 = vsyncpa [#allocation5], 0
    loop: start=0, step=1, limit=5
    $region2: #{tpu_custom_call.1} parent=1 // loop_pre_header
      _
    $region3: #{tpu_custom_call.1} parent=1 // loop_header
      %s13 = sphi 0, %s17
      %p14 = scmp.ge.s32.totalorder %s13, 5
      %s21 = sphi 0, %s21
      %s23 = sphi 0, %s21
      %s24 = sphi 0, %s23
      %s38 = sphi 0, %s24
      %s42 = sphi 0, %s42
      %s44 = sphi 0, %s42
      %s45 = sphi 0, %s44
      %s59 = sphi 0, %s45
      %s65 = sphi 0, %s67
      %s68 = sphi 0, %s65
      %s69 = sphi 0, %s68
      %s85 = sphi 0, %s69
      %s91 = sphi 0, %s93
      %s94 = sphi 0, %s91
      %s95 = sphi 0, %s94
      %s111 = sphi 0, %s95
      %s115 = sphi 0, %s115
      %s117 = sphi 0, %s115
      %s118 = sphi 0, %s117
      %s132 = sphi 0, %s118
    $region4: #{tpu_custom_call.1} parent=1 // loop_header_branch
      %16 = sbr.rel (%p14) target = $region8
    $region5: #{tpu_custom_call.1} parent=1 // loop_body
      %s18 = ssub.s32 %s13, 1
      %s19 = ssub.s32 %s13, 2
      %s20 = sadd.s32 %s13, 1
      %s22 = sadd.s32 %s21, 1
      %p25 = scmp.eq.s32.totalorder %s13, 2
      %p26 = scmp.ne.s32.totalorder %s21, %s23
      %p27 = scmp.eq.s32.totalorder %s13, 0
      %p28 = por %p26, %p27
      %p29 = scmp.ne.s32.totalorder %s21, %s23
      %p30 = scmp.eq.s32.totalorder %s18, 2
      %p31 = por %p29, %p30
      %p32 = scmp.ne.s32.totalorder %s23, %s24
      %p33 = scmp.eq.s32.totalorder %s18, 0
      %p34 = por %p32, %p33
      %p35 = scmp.ne.s32.totalorder %s23, %s24
      %p36 = scmp.eq.s32.totalorder %s19, 2
      %p37 = por %p35, %p36
      %p39 = scmp.ne.s32.totalorder %s24, %s38
      %p40 = scmp.eq.s32.totalorder %s19, 0
      %p41 = por %p39, %p40
      %s43 = sadd.s32 %s42, 1
      %p46 = scmp.eq.s32.totalorder %s13, 2
      %p47 = scmp.ne.s32.totalorder %s42, %s44
      %p48 = scmp.eq.s32.totalorder %s13, 0
      %p49 = por %p47, %p48
      %p50 = scmp.ne.s32.totalorder %s42, %s44
      %p51 = scmp.eq.s32.totalorder %s18, 2
      %p52 = por %p50, %p51
      %p53 = scmp.ne.s32.totalorder %s44, %s45
      %p54 = scmp.eq.s32.totalorder %s18, 0
      %p55 = por %p53, %p54
      %p56 = scmp.ne.s32.totalorder %s44, %s45
      %p57 = scmp.eq.s32.totalorder %s19, 2
      %p58 = por %p56, %p57
      %p60 = scmp.ne.s32.totalorder %s45, %s59
      %p61 = scmp.eq.s32.totalorder %s19, 0
      %p62 = por %p60, %p61
      %s63 = ssub.s32 %s13, %s20
      %p64 = scmp.eq.s32.totalorder %s63, 0
      %s66 = sadd.s32 %s65, 1
      %s67 = scalar_select %p64, %s65, %s66
      %p70 = pneg %p64
      %p71 = scmp.eq.s32.totalorder %s13, 2
      %p72 = por %p70, %p71
      %p73 = scmp.ne.s32.totalorder %s65, %s68
      %p74 = scmp.eq.s32.totalorder %s13, 0
      %p75 = por %p73, %p74
      %p76 = scmp.ne.s32.totalorder %s65, %s68
      %p77 = scmp.eq.s32.totalorder %s18, 2
      %p78 = por %p76, %p77
      %p79 = scmp.ne.s32.totalorder %s68, %s69
      %p80 = scmp.eq.s32.totalorder %s18, 0
      %p81 = por %p79, %p80
      %p82 = scmp.ne.s32.totalorder %s68, %s69
      %p83 = scmp.eq.s32.totalorder %s19, 2
      %p84 = por %p82, %p83
      %p86 = scmp.ne.s32.totalorder %s69, %s85
      %p87 = scmp.eq.s32.totalorder %s19, 0
      %p88 = por %p86, %p87
      %s89 = ssub.s32 %s13, %s20
      %p90 = scmp.eq.s32.totalorder %s89, 0
      %s92 = sadd.s32 %s91, 1
      %s93 = scalar_select %p90, %s91, %s92
      %p96 = pneg %p90
      %p97 = scmp.eq.s32.totalorder %s13, 2
      %p98 = por %p96, %p97
      %p99 = scmp.ne.s32.totalorder %s91, %s94
      %p100 = scmp.eq.s32.totalorder %s13, 0
      %p101 = por %p99, %p100
      %p102 = scmp.ne.s32.totalorder %s91, %s94
      %p103 = scmp.eq.s32.totalorder %s18, 2
      %p104 = por %p102, %p103
      %p105 = scmp.ne.s32.totalorder %s94, %s95
      %p106 = scmp.eq.s32.totalorder %s18, 0
      %p107 = por %p105, %p106
      %p108 = scmp.ne.s32.totalorder %s94, %s95
      %p109 = scmp.eq.s32.totalorder %s19, 2
      %p110 = por %p108, %p109
      %p112 = scmp.ne.s32.totalorder %s95, %s111
      %p113 = scmp.eq.s32.totalorder %s19, 0
      %p114 = por %p112, %p113
      %s116 = sadd.s32 %s115, 1
      %p119 = scmp.eq.s32.totalorder %s13, 2
      %p120 = scmp.ne.s32.totalorder %s115, %s117
      %p121 = scmp.eq.s32.totalorder %s13, 0
      %p122 = por %p120, %p121
      %p123 = scmp.ne.s32.totalorder %s115, %s117
      %p124 = scmp.eq.s32.totalorder %s18, 2
      %p125 = por %p123, %p124
      %p126 = scmp.ne.s32.totalorder %s117, %s118
      %p127 = scmp.eq.s32.totalorder %s18, 0
      %p128 = por %p126, %p127
      %p129 = scmp.ne.s32.totalorder %s117, %s118
      %p130 = scmp.eq.s32.totalorder %s19, 2
      %p131 = por %p129, %p130
      %p133 = scmp.ne.s32.totalorder %s118, %s132
      %p134 = scmp.eq.s32.totalorder %s19, 0
      %p135 = por %p133, %p134
      %p136 = scmp.le.s32.totalorder 1, %s13
      %p137 = scmp.lt.s32.totalorder %s13, 4
      %p138 = pnand %p136, %p137
      %p139 = pneg %p138
      // Predicated region
      $region9: #{tpu_custom_call.1} parent=5 // pred_check
        _
      $region10: #{tpu_custom_call.1} parent=5 // pred_check_branch
        %141 = sbr.rel (%p138) target = $region12
      $region11: #{tpu_custom_call.1} parent=5 // pred_region
        %s142 = ssub.s32 %s13, 1
        // Predicated region
        $region13: #{tpu_custom_call.1} parent=11 // pred_check
          %p143 = pneg %p34
        $region14: #{tpu_custom_call.1} parent=11 // pred_check_branch
          %145 = sbr.rel (%p143) target = $region16
        $region15: #{tpu_custom_call.1} parent=11 // pred_region
          %s147 = ssub.s32 1024, 1024
          %148 = vsyncadd [#allocation4], %s147
          %s149 = sshll.u32 [#allocation3], 4
          %s150 = int_to_ptr.vmem [resolvable:$true] %s149
          %155 = dma.hbm_to_vmem [thread:$0]  %s0, 1024, %s150, [#allocation4], 64, 64, 4
        $region16: #{tpu_custom_call.1} parent=11 // pred_fallthru
          _
        // Predicated region
        $region17: #{tpu_custom_call.1} parent=11 // pred_check
          %p156 = pneg %p55
        $region18: #{tpu_custom_call.1} parent=11 // pred_check_branch
          %158 = sbr.rel (%p156) target = $region20
        $region19: #{tpu_custom_call.1} parent=11 // pred_region
          %s160 = ssub.s32 1024, 1024
          %161 = vsyncadd [#allocation7], %s160
          %s162 = sshll.u32 [#allocation6], 4
          %s163 = int_to_ptr.vmem [resolvable:$true] %s162
          %168 = dma.hbm_to_vmem [thread:$0]  %s1, 1024, %s163, [#allocation7], 64, 64, 4
        $region20: #{tpu_custom_call.1} parent=11 // pred_fallthru
          _
      $region12: #{tpu_custom_call.1} parent=5 // pred_fallthru
        _
      %p169 = scmp.lt.s32.totalorder %s13, 3
      // Predicated region
      $region21: #{tpu_custom_call.1} parent=5 // pred_check
        %p170 = pneg %p169
      $region22: #{tpu_custom_call.1} parent=5 // pred_check_branch
        %172 = sbr.rel (%p170) target = $region24
      $region23: #{tpu_custom_call.1} parent=5 // pred_region
        // Predicated region
        $region25: #{tpu_custom_call.1} parent=23 // pred_check
          %p173 = pneg %p75
        $region26: #{tpu_custom_call.1} parent=23 // pred_check_branch
          %175 = sbr.rel (%p173) target = $region28
        $region27: #{tpu_custom_call.1} parent=23 // pred_region
          %s176 = sand.u32 %s13, 1
          %s177 = scalar_lea.sflag [#allocation4], %s176
          %s178 = sand.u32 %s65, 1
          %s179 = smul.addr %s178, 64
          %s180 = scalar_lea.vmem [#allocation8], %s179
          %s182 = ssub.s32 1024, 1024
          %183 = vsyncadd %s177, %s182
          %s184 = smul.addr %s13, 16
          %s185 = smul.addr %s184, 64
          %s186 = scalar_lea.hbm %s2, %s185
          %s187 = sshll.u32 %s180, 4
          %s188 = int_to_ptr.vmem [resolvable:$true] %s187
          %193 = dma.hbm_to_vmem [thread:$0]  %s186, 1024, %s188, %s177, 64, 64, 4
        $region28: #{tpu_custom_call.1} parent=23 // pred_fallthru
          _
        // Predicated region
        $region29: #{tpu_custom_call.1} parent=23 // pred_check
          %p194 = pneg %p101
        $region30: #{tpu_custom_call.1} parent=23 // pred_check_branch
          %196 = sbr.rel (%p194) target = $region32
        $region31: #{tpu_custom_call.1} parent=23 // pred_region
          %p197 = scmp.lt.s32.totalorder %s13, 2
          %s198 = scalar_select %p197, %s13, 2
          %s199 = scalar_lea.vmem %s3, %s198
        $region32: #{tpu_custom_call.1} parent=23 // pred_fallthru
          _
      $region24: #{tpu_custom_call.1} parent=5 // pred_fallthru
        _
      %p200 = scmp.le.s32.totalorder 1, %s13
      %p201 = scmp.lt.s32.totalorder %s13, 4
      %p202 = pnand %p200, %p201
      %p203 = pneg %p202
      // Predicated region
      $region33: #{tpu_custom_call.1} parent=5 // pred_check
        _
      $region34: #{tpu_custom_call.1} parent=5 // pred_check_branch
        %205 = sbr.rel (%p202) target = $region36
      $region35: #{tpu_custom_call.1} parent=5 // pred_region
        %s206 = ssub.s32 %s13, 1
        // Predicated region
        $region37: #{tpu_custom_call.1} parent=35 // pred_check
          %p207 = pneg %p34
        $region38: #{tpu_custom_call.1} parent=35 // pred_check_branch
          %209 = sbr.rel (%p207) target = $region40
        $region39: #{tpu_custom_call.1} parent=35 // pred_region
          %210 = dma.done [#allocation4], 1024
        $region40: #{tpu_custom_call.1} parent=35 // pred_fallthru
          _
        // Predicated region
        $region41: #{tpu_custom_call.1} parent=35 // pred_check
          %p211 = pneg %p55
        $region42: #{tpu_custom_call.1} parent=35 // pred_check_branch
          %213 = sbr.rel (%p211) target = $region44
        $region43: #{tpu_custom_call.1} parent=35 // pred_region
          %214 = dma.done [#allocation7], 1024
        $region44: #{tpu_custom_call.1} parent=35 // pred_fallthru
          _
        %s215 = sand.u32 %s18, 1
        %s216 = scalar_lea.sflag [#allocation4], %s215
        %s217 = sand.u32 %s68, 1
        %s218 = smul.addr %s217, 64
        %s219 = scalar_lea.vmem [#allocation8], %s218
        // Predicated region
        $region45: #{tpu_custom_call.1} parent=35 // pred_check
          %p220 = pneg %p81
        $region46: #{tpu_custom_call.1} parent=35 // pred_check_branch
          %222 = sbr.rel (%p220) target = $region48
        $region47: #{tpu_custom_call.1} parent=35 // pred_region
          %223 = dma.done %s216, 1024
        $region48: #{tpu_custom_call.1} parent=35 // pred_fallthru
          _
        %p224 = pneg %p34
        %p225 = pneg %p31
        %p226 = pneg %p55
        %p227 = pneg %p52
        %s228 = sand.u32 %s18, 1
        %s229 = scalar_lea.sflag [#allocation4], %s228
        %s230 = sand.u32 %s68, 1
        %s231 = smul.addr %s230, 64
        %s232 = scalar_lea.vmem [#allocation8], %s231
        %p233 = pneg %p81
        %p234 = pneg %p78
        %p235 = scmp.lt.s32.totalorder %s18, 2
        %s236 = scalar_select %p235, %s18, 2
        %s237 = scalar_lea.vmem %s3, %s236
        %p238 = pneg %p107
        %p239 = pneg %p104
        %p240 = pneg %p128
        %p241 = pneg %p125
        %p242 = scmp.lt.s32.totalorder %s18, 2
        %s243 = scalar_select %p242, %s18, 2
        %s244 = scalar_lea.vmem %s3, %s243
        %p246 = scmp.eq.s32.totalorder %s18, 0
        // Predicated region
        $region49: #{tpu_custom_call.1} parent=35 // pred_check
          %p247 = pneg %p246
        $region50: #{tpu_custom_call.1} parent=35 // pred_check_branch
          %249 = sbr.rel (%p247) target = $region52
        $region51: #{tpu_custom_call.1} parent=35 // pred_region
          %v250 = vld [vmem:[#allocation6] sm:$0xf]
          %v251 = vld [vmem:[#allocation6 + $0x4] sm:$0xf]
          %v252 = vld [vmem:[#allocation6 + $0x8] sm:$0xf]
          %v253 = vld [vmem:[#allocation6 + $0xc] sm:$0xf]
          %v254 = vld [vmem:[#allocation6 + $0x10] sm:$0xf]
          %v255 = vld [vmem:[#allocation6 + $0x14] sm:$0xf]
          %v256 = vld [vmem:[#allocation6 + $0x18] sm:$0xf]
          %v257 = vld [vmem:[#allocation6 + $0x1c] sm:$0xf]
          %v258 = vld [vmem:[#allocation6 + $0x20] sm:$0xf]
          %v259 = vld [vmem:[#allocation6 + $0x24] sm:$0xf]
          %v260 = vld [vmem:[#allocation6 + $0x28] sm:$0xf]
          %v261 = vld [vmem:[#allocation6 + $0x2c] sm:$0xf]
          %v262 = vld [vmem:[#allocation6 + $0x30] sm:$0xf]
          %v263 = vld [vmem:[#allocation6 + $0x34] sm:$0xf]
          %v264 = vld [vmem:[#allocation6 + $0x38] sm:$0xf]
          %v265 = vld [vmem:[#allocation6 + $0x3c] sm:$0xf]
          %v282 = vunpack.c.l.b16 %v250
          %v283 = vunpack.c.l.b16 %v251
          %v284 = vunpack.c.l.b16 %v252
          %v285 = vunpack.c.l.b16 %v253
          %v286 = vunpack.c.l.b16 %v254
          %v287 = vunpack.c.l.b16 %v255
          %v288 = vunpack.c.l.b16 %v256
          %v289 = vunpack.c.l.b16 %v257
          %v290 = vunpack.c.l.b16 %v258
          %v291 = vunpack.c.l.b16 %v259
          %v292 = vunpack.c.l.b16 %v260
          %v293 = vunpack.c.l.b16 %v261
          %v294 = vunpack.c.l.b16 %v262
          %v295 = vunpack.c.l.b16 %v263
          %v296 = vunpack.c.l.b16 %v264
          %v297 = vunpack.c.l.b16 %v265
          %v298 = vpack.c.b16 %v283, %v282
          %v299 = vpack.c.b16 %v285, %v284
          %v300 = vpack.c.b16 %v287, %v286
          %v301 = vpack.c.b16 %v289, %v288
          %v302 = vpack.c.b16 %v291, %v290
          %v303 = vpack.c.b16 %v293, %v292
          %v304 = vpack.c.b16 %v295, %v294
          %v305 = vpack.c.b16 %v297, %v296
          %314 = vst [vmem:[#allocation2] sm:$0xff] %v298
          %315 = vst [vmem:[#allocation2 + $0x8] sm:$0xff] %v299
          %316 = vst [vmem:[#allocation2 + $0x10] sm:$0xff] %v300
          %317 = vst [vmem:[#allocation2 + $0x18] sm:$0xff] %v301
          %318 = vst [vmem:[#allocation2 + $0x20] sm:$0xff] %v302
          %319 = vst [vmem:[#allocation2 + $0x28] sm:$0xff] %v303
          %320 = vst [vmem:[#allocation2 + $0x30] sm:$0xff] %v304
          %321 = vst [vmem:[#allocation2 + $0x38] sm:$0xff] %v305
        $region52: #{tpu_custom_call.1} parent=35 // pred_fallthru
          _
        %v322 = vld [vmem:[#allocation2] sm:$0xff]
        %v323 = vld [vmem:[#allocation2 + $0x8] sm:$0xff]
        %v324 = vld [vmem:[#allocation2 + $0x10] sm:$0xff]
        %v325 = vld [vmem:[#allocation2 + $0x18] sm:$0xff]
        %v326 = vld [vmem:[#allocation2 + $0x20] sm:$0xff]
        %v327 = vld [vmem:[#allocation2 + $0x28] sm:$0xff]
        %v328 = vld [vmem:[#allocation2 + $0x30] sm:$0xff]
        %v329 = vld [vmem:[#allocation2 + $0x38] sm:$0xff]
        %v330 = vld [vmem:[%s219] sm:$0xf]
        %v331 = vld [vmem:[%s219 + $0x4] sm:$0xf]
        %v332 = vld [vmem:[%s219 + $0x8] sm:$0xf]
        %v333 = vld [vmem:[%s219 + $0xc] sm:$0xf]
        %v334 = vld [vmem:[%s219 + $0x10] sm:$0xf]
        %v335 = vld [vmem:[%s219 + $0x14] sm:$0xf]
        %v336 = vld [vmem:[%s219 + $0x18] sm:$0xf]
        %v337 = vld [vmem:[%s219 + $0x1c] sm:$0xf]
        %v338 = vld [vmem:[%s219 + $0x20] sm:$0xf]
        %v339 = vld [vmem:[%s219 + $0x24] sm:$0xf]
        %v340 = vld [vmem:[%s219 + $0x28] sm:$0xf]
        %v341 = vld [vmem:[%s219 + $0x2c] sm:$0xf]
        %v342 = vld [vmem:[%s219 + $0x30] sm:$0xf]
        %v343 = vld [vmem:[%s219 + $0x34] sm:$0xf]
        %v344 = vld [vmem:[%s219 + $0x38] sm:$0xf]
        %v345 = vld [vmem:[%s219 + $0x3c] sm:$0xf]
        %v362 = vunpack.c.l.b16 %v330
        %v363 = vunpack.c.l.b16 %v331
        %v364 = vunpack.c.l.b16 %v332
        %v365 = vunpack.c.l.b16 %v333
        %v366 = vunpack.c.l.b16 %v334
        %v367 = vunpack.c.l.b16 %v335
        %v368 = vunpack.c.l.b16 %v336
        %v369 = vunpack.c.l.b16 %v337
        %v370 = vunpack.c.l.b16 %v338
        %v371 = vunpack.c.l.b16 %v339
        %v372 = vunpack.c.l.b16 %v340
        %v373 = vunpack.c.l.b16 %v341
        %v374 = vunpack.c.l.b16 %v342
        %v375 = vunpack.c.l.b16 %v343
        %v376 = vunpack.c.l.b16 %v344
        %v377 = vunpack.c.l.b16 %v345
        %v378 = vpack.c.b16 %v363, %v362
        %v379 = vpack.c.b16 %v365, %v364
        %v380 = vpack.c.b16 %v367, %v366
        %v381 = vpack.c.b16 %v369, %v368
        %v382 = vpack.c.b16 %v371, %v370
        %v383 = vpack.c.b16 %v373, %v372
        %v384 = vpack.c.b16 %v375, %v374
        %v385 = vpack.c.b16 %v377, %v376
        %394 = vmatprep.subr.bf16.mxu0 0
        %395 = vmatpush1.bf16.msra.mxu0 %v378
        %396 = vmatprep.subr.bf16.mxu0 0
        %397 = vmatpush1.bf16.msra.mxu0 %v379
        %398 = vmatprep.subr.bf16.mxu0 0
        %399 = vmatpush1.bf16.msra.mxu0 %v380
        %400 = vmatprep.subr.bf16.mxu0 0
        %401 = vmatpush1.bf16.msra.mxu0 %v381
        %402 = vmatprep.subr.bf16.mxu0 0
        %403 = vmatpush1.bf16.msra.mxu0 %v382
        %404 = vmatprep.subr.bf16.mxu0 0
        %405 = vmatpush1.bf16.msra.mxu0 %v383
        %406 = vmatprep.subr.bf16.mxu0 0
        %407 = vmatpush1.bf16.msra.mxu0 %v384
        %408 = vmatprep.subr.bf16.mxu0 0
        %409 = vmatpush1.bf16.msra.mxu0 %v385
        %410 = vmatprep.subr.bf16.mxu0 0
        %411 = vmatpush1.bf16.msra.mxu0 0
        %412 = vmatprep.subr.bf16.mxu0 0
        %413 = vmatpush1.bf16.msra.mxu0 0
        %414 = vmatprep.subr.bf16.mxu0 0
        %415 = vmatpush1.bf16.msra.mxu0 0
        %416 = vmatprep.subr.bf16.mxu0 0
        %417 = vmatpush1.bf16.msra.mxu0 0
        %418 = vmatprep.subr.bf16.mxu0 0
        %419 = vmatpush1.bf16.msra.mxu0 0
        %420 = vmatprep.subr.bf16.mxu0 0
        %421 = vmatpush1.bf16.msra.mxu0 0
        %422 = vmatprep.subr.bf16.mxu0 0
        %423 = vmatpush1.bf16.msra.mxu0 0
        %424 = vmatprep.subr.bf16.mxu0 0
        %425 = vmatpush1.bf16.msra.mxu0 0
        %426 = vmatprep.mubr.bf16.mxu0 0
        %427 = vmatmul.mubr.bf16.gmra.mrb[0].mxu0 %v322
        %v428 = vpop.f32.mrb[0].mxu0
        %v429 = vadd.f32 0.0, %v428
        %v430 = vpop.f32.mrb[0].mxu0
        %v431 = vpop.f32.mrb[0].mxu0
        %v432 = vadd.f32 0.0, %v431
        %v433 = vpop.f32.mrb[0].mxu0
        %434 = vmatprep.mubr.bf16.mxu0 0
        %435 = vmatmul.mubr.bf16.gmra.mrb[0].mxu0 %v323
        %v436 = vpop.f32.mrb[0].mxu0
        %v437 = vadd.f32 0.0, %v436
        %v438 = vpop.f32.mrb[0].mxu0
        %v439 = vpop.f32.mrb[0].mxu0
        %v440 = vadd.f32 0.0, %v439
        %v441 = vpop.f32.mrb[0].mxu0
        %442 = vmatprep.mubr.bf16.mxu0 0
        %443 = vmatmul.mubr.bf16.gmra.mrb[0].mxu0 %v324
        %v444 = vpop.f32.mrb[0].mxu0
        %v445 = vadd.f32 0.0, %v444
        %v446 = vpop.f32.mrb[0].mxu0
        %v447 = vpop.f32.mrb[0].mxu0
        %v448 = vadd.f32 0.0, %v447
        %v449 = vpop.f32.mrb[0].mxu0
        %450 = vmatprep.mubr.bf16.mxu0 0
        %451 = vmatmul.mubr.bf16.gmra.mrb[0].mxu0 %v325
        %v452 = vpop.f32.mrb[0].mxu0
        %v453 = vadd.f32 0.0, %v452
        %v454 = vpop.f32.mrb[0].mxu0
        %v455 = vpop.f32.mrb[0].mxu0
        %v456 = vadd.f32 0.0, %v455
        %v457 = vpop.f32.mrb[0].mxu0
        %458 = vmatprep.mubr.bf16.mxu0 0
        %459 = vmatmul.mubr.bf16.gmra.mrb[0].mxu0 %v326
        %v460 = vpop.f32.mrb[0].mxu0
        %v461 = vadd.f32 0.0, %v460
        %v462 = vpop.f32.mrb[0].mxu0
        %v463 = vpop.f32.mrb[0].mxu0
        %v464 = vadd.f32 0.0, %v463
        %v465 = vpop.f32.mrb[0].mxu0
        %466 = vmatprep.mubr.bf16.mxu0 0
        %467 = vmatmul.mubr.bf16.gmra.mrb[0].mxu0 %v327
        %v468 = vpop.f32.mrb[0].mxu0
        %v469 = vadd.f32 0.0, %v468
        %v470 = vpop.f32.mrb[0].mxu0
        %v471 = vpop.f32.mrb[0].mxu0
        %v472 = vadd.f32 0.0, %v471
        %v473 = vpop.f32.mrb[0].mxu0
        %474 = vmatprep.mubr.bf16.mxu0 0
        %475 = vmatmul.mubr.bf16.gmra.mrb[0].mxu0 %v328
        %v476 = vpop.f32.mrb[0].mxu0
        %v477 = vadd.f32 0.0, %v476
        %v478 = vpop.f32.mrb[0].mxu0
        %v479 = vpop.f32.mrb[0].mxu0
        %v480 = vadd.f32 0.0, %v479
        %v481 = vpop.f32.mrb[0].mxu0
        %482 = vmatprep.mubr.bf16.mxu0 0
        %483 = vmatmul.mubr.bf16.gmra.mrb[0].mxu0 %v329
        %v484 = vpop.f32.mrb[0].mxu0
        %v485 = vadd.f32 0.0, %v484
        %v486 = vpop.f32.mrb[0].mxu0
        %v487 = vpop.f32.mrb[0].mxu0
        %v488 = vadd.f32 0.0, %v487
        %v489 = vpop.f32.mrb[0].mxu0
        %490 = vdwg.mxu0
        %v491 = vld [vmem:[#allocation3] sm:$0xf]
        %v492 = vld [vmem:[#allocation3 + $0x4] sm:$0xf]
        %v493 = vld [vmem:[#allocation3 + $0x8] sm:$0xf]
        %v494 = vld [vmem:[#allocation3 + $0xc] sm:$0xf]
        %v495 = vld [vmem:[#allocation3 + $0x10] sm:$0xf]
        %v496 = vld [vmem:[#allocation3 + $0x14] sm:$0xf]
        %v497 = vld [vmem:[#allocation3 + $0x18] sm:$0xf]
        %v498 = vld [vmem:[#allocation3 + $0x1c] sm:$0xf]
        %v499 = vld [vmem:[#allocation3 + $0x20] sm:$0xf]
        %v500 = vld [vmem:[#allocation3 + $0x24] sm:$0xf]
        %v501 = vld [vmem:[#allocation3 + $0x28] sm:$0xf]
        %v502 = vld [vmem:[#allocation3 + $0x2c] sm:$0xf]
        %v503 = vld [vmem:[#allocation3 + $0x30] sm:$0xf]
        %v504 = vld [vmem:[#allocation3 + $0x34] sm:$0xf]
        %v505 = vld [vmem:[#allocation3 + $0x38] sm:$0xf]
        %v506 = vld [vmem:[#allocation3 + $0x3c] sm:$0xf]
        %v507 = vpack.c.bf16 %v432, %v429
        %v508 = vpack.c.bf16 %v440, %v437
        %v509 = vpack.c.bf16 %v448, %v445
        %v510 = vpack.c.bf16 %v456, %v453
        %v511 = vpack.c.bf16 %v464, %v461
        %v512 = vpack.c.bf16 %v472, %v469
        %v513 = vpack.c.bf16 %v480, %v477
        %v514 = vpack.c.bf16 %v488, %v485
        %v515 = vld [vmem:[%s244] sm:$0x1]
        %v517 = vlaneseq
        %v518 = vshrl.u32 %v517, 7
        %v519 = vsub.s32 0, %v518
        %v520 = vrot.slane %v515, %v519
        %v538 = vunpack.c.l.b16 %v491
        %v539 = vunpack.c.l.b16 %v492
        %v540 = vunpack.c.l.b16 %v493
        %v541 = vunpack.c.l.b16 %v494
        %v542 = vunpack.c.l.b16 %v495
        %v543 = vunpack.c.l.b16 %v496
        %v544 = vunpack.c.l.b16 %v497
        %v545 = vunpack.c.l.b16 %v498
        %v546 = vunpack.c.l.b16 %v499
        %v547 = vunpack.c.l.b16 %v500
        %v548 = vunpack.c.l.b16 %v501
        %v549 = vunpack.c.l.b16 %v502
        %v550 = vunpack.c.l.b16 %v503
        %v551 = vunpack.c.l.b16 %v504
        %v552 = vunpack.c.l.b16 %v505
        %v553 = vunpack.c.l.b16 %v506
        %v554 = vpack.c.b16 %v539, %v538
        %v555 = vpack.c.b16 %v541, %v540
        %v556 = vpack.c.b16 %v543, %v542
        %v557 = vpack.c.b16 %v545, %v544
        %v558 = vpack.c.b16 %v547, %v546
        %v559 = vpack.c.b16 %v549, %v548
        %v560 = vpack.c.b16 %v551, %v550
        %v561 = vpack.c.b16 %v553, %v552
        %570 = vmatprep.subr.bf16.mxu0 0
        %571 = vmatpush1.bf16.msra.mxu0 %v507
        %572 = vmatprep.subr.bf16.mxu0 0
        %573 = vmatpush1.bf16.msra.mxu0 %v508
        %574 = vmatprep.subr.bf16.mxu0 0
        %575 = vmatpush1.bf16.msra.mxu0 %v509
        %576 = vmatprep.subr.bf16.mxu0 0
        %577 = vmatpush1.bf16.msra.mxu0 %v510
        %578 = vmatprep.subr.bf16.mxu0 0
        %579 = vmatpush1.bf16.msra.mxu0 %v511
        %580 = vmatprep.subr.bf16.mxu0 0
        %581 = vmatpush1.bf16.msra.mxu0 %v512
        %582 = vmatprep.subr.bf16.mxu0 0
        %583 = vmatpush1.bf16.msra.mxu0 %v513
        %584 = vmatprep.subr.bf16.mxu0 0
        %585 = vmatpush1.bf16.msra.mxu0 %v514
        %586 = vmatprep.subr.bf16.mxu0 0
        %587 = vmatpush1.bf16.msra.mxu0 0
        %588 = vmatprep.subr.bf16.mxu0 0
        %589 = vmatpush1.bf16.msra.mxu0 0
        %590 = vmatprep.subr.bf16.mxu0 0
        %591 = vmatpush1.bf16.msra.mxu0 0
        %592 = vmatprep.subr.bf16.mxu0 0
        %593 = vmatpush1.bf16.msra.mxu0 0
        %594 = vmatprep.subr.bf16.mxu0 0
        %595 = vmatpush1.bf16.msra.mxu0 0
        %596 = vmatprep.subr.bf16.mxu0 0
        %597 = vmatpush1.bf16.msra.mxu0 0
        %598 = vmatprep.subr.bf16.mxu0 0
        %599 = vmatpush1.bf16.msra.mxu0 0
        %600 = vmatprep.subr.bf16.mxu0 0
        %601 = vmatpush1.bf16.msra.mxu0 0
        %602 = vmatprep.mubr.bf16.mxu0 0
        %603 = vmatmul.mubr.bf16.gmra.mrb[0].mxu0 %v554
        %v604 = vpop.f32.mrb[0].mxu0
        %v605 = vadd.f32 %v520, %v604
        %v606 = vpop.f32.mrb[0].mxu0
        %v607 = vpop.f32.mrb[0].mxu0
        %v608 = vadd.f32 %v520, %v607
        %v609 = vpop.f32.mrb[0].mxu0
        %610 = vmatprep.mubr.bf16.mxu0 0
        %611 = vmatmul.mubr.bf16.gmra.mrb[0].mxu0 %v555
        %v612 = vpop.f32.mrb[0].mxu0
        %v613 = vadd.f32 %v520, %v612
        %v614 = vpop.f32.mrb[0].mxu0
        %v615 = vpop.f32.mrb[0].mxu0
        %v616 = vadd.f32 %v520, %v615
        %v617 = vpop.f32.mrb[0].mxu0
        %618 = vmatprep.mubr.bf16.mxu0 0
        %619 = vmatmul.mubr.bf16.gmra.mrb[0].mxu0 %v556
        %v620 = vpop.f32.mrb[0].mxu0
        %v621 = vadd.f32 %v520, %v620
        %v622 = vpop.f32.mrb[0].mxu0
        %v623 = vpop.f32.mrb[0].mxu0
        %v624 = vadd.f32 %v520, %v623
        %v625 = vpop.f32.mrb[0].mxu0
        %626 = vmatprep.mubr.bf16.mxu0 0
        %627 = vmatmul.mubr.bf16.gmra.mrb[0].mxu0 %v557
        %v628 = vpop.f32.mrb[0].mxu0
        %v629 = vadd.f32 %v520, %v628
        %v630 = vpop.f32.mrb[0].mxu0
        %v631 = vpop.f32.mrb[0].mxu0
        %v632 = vadd.f32 %v520, %v631
        %v633 = vpop.f32.mrb[0].mxu0
        %634 = vmatprep.mubr.bf16.mxu0 0
        %635 = vmatmul.mubr.bf16.gmra.mrb[0].mxu0 %v558
        %v636 = vpop.f32.mrb[0].mxu0
        %v637 = vadd.f32 %v520, %v636
        %v638 = vpop.f32.mrb[0].mxu0
        %v639 = vpop.f32.mrb[0].mxu0
        %v640 = vadd.f32 %v520, %v639
        %v641 = vpop.f32.mrb[0].mxu0
        %642 = vmatprep.mubr.bf16.mxu0 0
        %643 = vmatmul.mubr.bf16.gmra.mrb[0].mxu0 %v559
        %v644 = vpop.f32.mrb[0].mxu0
        %v645 = vadd.f32 %v520, %v644
        %v646 = vpop.f32.mrb[0].mxu0
        %v647 = vpop.f32.mrb[0].mxu0
        %v648 = vadd.f32 %v520, %v647
        %v649 = vpop.f32.mrb[0].mxu0
        %650 = vmatprep.mubr.bf16.mxu0 0
        %651 = vmatmul.mubr.bf16.gmra.mrb[0].mxu0 %v560
        %v652 = vpop.f32.mrb[0].mxu0
        %v653 = vadd.f32 %v520, %v652
        %v654 = vpop.f32.mrb[0].mxu0
        %v655 = vpop.f32.mrb[0].mxu0
        %v656 = vadd.f32 %v520, %v655
        %v657 = vpop.f32.mrb[0].mxu0
        %658 = vmatprep.mubr.bf16.mxu0 0
        %659 = vmatmul.mubr.bf16.gmra.mrb[0].mxu0 %v561
        %v660 = vpop.f32.mrb[0].mxu0
        %v661 = vadd.f32 %v520, %v660
        %v662 = vpop.f32.mrb[0].mxu0
        %v663 = vpop.f32.mrb[0].mxu0
        %v664 = vadd.f32 %v520, %v663
        %v665 = vpop.f32.mrb[0].mxu0
        %666 = vdwg.mxu0
        %p667 = scmp.lt.s32.totalorder %s18, 2
        // Predicated region
        $region53: #{tpu_custom_call.1} parent=35 // pred_check
          %p668 = pneg %p667
        $region54: #{tpu_custom_call.1} parent=35 // pred_check_branch
          %670 = sbr.rel (%p668) target = $region56
        $region55: #{tpu_custom_call.1} parent=35 // pred_region
          %v671 = vmax.f32 %v605, 0.0
          %v672 = vmax.f32 %v608, 0.0
          %v673 = vmax.f32 %v613, 0.0
          %v674 = vmax.f32 %v616, 0.0
          %v675 = vmax.f32 %v621, 0.0
          %v676 = vmax.f32 %v624, 0.0
          %v677 = vmax.f32 %v629, 0.0
          %v678 = vmax.f32 %v632, 0.0
          %v679 = vmax.f32 %v637, 0.0
          %v680 = vmax.f32 %v640, 0.0
          %v681 = vmax.f32 %v645, 0.0
          %v682 = vmax.f32 %v648, 0.0
          %v683 = vmax.f32 %v653, 0.0
          %v684 = vmax.f32 %v656, 0.0
          %v685 = vmax.f32 %v661, 0.0
          %v686 = vmax.f32 %v664, 0.0
          %v687 = vpack.c.bf16 %v672, %v671
          %v688 = vpack.c.bf16 %v674, %v673
          %v689 = vpack.c.bf16 %v676, %v675
          %v690 = vpack.c.bf16 %v678, %v677
          %v691 = vpack.c.bf16 %v680, %v679
          %v692 = vpack.c.bf16 %v682, %v681
          %v693 = vpack.c.bf16 %v684, %v683
          %v694 = vpack.c.bf16 %v686, %v685
          %695 = vst [vmem:[#allocation2] sm:$0xff] %v687
          %696 = vst [vmem:[#allocation2 + $0x8] sm:$0xff] %v688
          %697 = vst [vmem:[#allocation2 + $0x10] sm:$0xff] %v689
          %698 = vst [vmem:[#allocation2 + $0x18] sm:$0xff] %v690
          %699 = vst [vmem:[#allocation2 + $0x20] sm:$0xff] %v691
          %700 = vst [vmem:[#allocation2 + $0x28] sm:$0xff] %v692
          %701 = vst [vmem:[#allocation2 + $0x30] sm:$0xff] %v693
          %702 = vst [vmem:[#allocation2 + $0x38] sm:$0xff] %v694
        $region56: #{tpu_custom_call.1} parent=35 // pred_fallthru
          _
        %p703 = scmp.eq.s32.totalorder %s18, 2
        // Predicated region
        $region57: #{tpu_custom_call.1} parent=35 // pred_check
          %p704 = pneg %p703
        $region58: #{tpu_custom_call.1} parent=35 // pred_check_branch
          %706 = sbr.rel (%p704) target = $region60
        $region59: #{tpu_custom_call.1} parent=35 // pred_region
          %707 = vst [vmem:[#allocation9] sm:$0xff] %v605
          %708 = vst [vmem:[#allocation9 + $0x8] sm:$0xff] %v608
          %709 = vst [vmem:[#allocation9 + $0x10] sm:$0xff] %v613
          %710 = vst [vmem:[#allocation9 + $0x18] sm:$0xff] %v616
          %711 = vst [vmem:[#allocation9 + $0x20] sm:$0xff] %v621
          %712 = vst [vmem:[#allocation9 + $0x28] sm:$0xff] %v624
          %713 = vst [vmem:[#allocation9 + $0x30] sm:$0xff] %v629
          %714 = vst [vmem:[#allocation9 + $0x38] sm:$0xff] %v632
          %715 = vst [vmem:[#allocation9 + $0x40] sm:$0xff] %v637
          %716 = vst [vmem:[#allocation9 + $0x48] sm:$0xff] %v640
          %717 = vst [vmem:[#allocation9 + $0x50] sm:$0xff] %v645
          %718 = vst [vmem:[#allocation9 + $0x58] sm:$0xff] %v648
          %719 = vst [vmem:[#allocation9 + $0x60] sm:$0xff] %v653
          %720 = vst [vmem:[#allocation9 + $0x68] sm:$0xff] %v656
          %721 = vst [vmem:[#allocation9 + $0x70] sm:$0xff] %v661
          %722 = vst [vmem:[#allocation9 + $0x78] sm:$0xff] %v664
        $region60: #{tpu_custom_call.1} parent=35 // pred_fallthru
          _
        // Predicated region
        $region61: #{tpu_custom_call.1} parent=35 // pred_check
          %p723 = pneg %p125
        $region62: #{tpu_custom_call.1} parent=35 // pred_check_branch
          %725 = sbr.rel (%p723) target = $region64
        $region63: #{tpu_custom_call.1} parent=35 // pred_region
          %s727 = ssub.s32 2048, 2048
          %728 = vsyncadd [#allocation5], %s727
          %s729 = sshll.u32 [#allocation9], 4
          %s730 = int_to_ptr.vmem [resolvable:$true] %s729
          %735 = dma.vmem_to_hbm [thread:$0]  %s730, 2048, %s4, [#allocation5], 128, 128, 8
        $region64: #{tpu_custom_call.1} parent=35 // pred_fallthru
          _
        // Predicated region
        $region65: #{tpu_custom_call.1} parent=35 // pred_check
          %p736 = pneg %p125
        $region66: #{tpu_custom_call.1} parent=35 // pred_check_branch
          %738 = sbr.rel (%p736) target = $region68
        $region67: #{tpu_custom_call.1} parent=35 // pred_region
          %739 = dma.done [#allocation5], 2048
        $region68: #{tpu_custom_call.1} parent=35 // pred_fallthru
          _
      $region36: #{tpu_custom_call.1} parent=5 // pred_fallthru
        _
      %p740 = scmp.le.s32.totalorder 2, %s13
      // Predicated region
      $region69: #{tpu_custom_call.1} parent=5 // pred_check
        %p741 = pneg %p740
      $region70: #{tpu_custom_call.1} parent=5 // pred_check_branch
        %743 = sbr.rel (%p741) target = $region72
      $region71: #{tpu_custom_call.1} parent=5 // pred_region
        %s744 = ssub.s32 %s13, 2
      $region72: #{tpu_custom_call.1} parent=5 // pred_fallthru
        _
    $region6: #{tpu_custom_call.1} parent=1 // loop_footer
      %s17 = sadd.s32 1, %s13
    $region7: #{tpu_custom_call.1} parent=1 // loop_footer_branch
      %12 = sbr.rel target = $region3
    $region8: #{tpu_custom_call.1} parent=1 // loop_exit
      _
    %745 = vsyncpa [#allocation4], 1
    %s746 = scalar_lea.sflag [#allocation4], 1
    %747 = vsyncpa %s746, 1
    %748 = vsyncpa [#allocation7], 1
    %749 = vsyncpa [#allocation5], 1
    %s750 = scalar_lea.sflag [#allocation5], 1
    %751 = vsyncpa %s750, 1

</llo_original>
